<compile_context>
chip_gen: v7x
topology: tpu7x:2x2x1
jax: 0.10.0
libtpu: 0.0.40
codegen_flags: <defaults>
</compile_context>

<pallas_src>
import functools

import jax
import jax.numpy as jnp
from jax.experimental import pallas as pl
from jax.experimental.pallas import tpu as pltpu

_MIB = 1024 * 1024


def _round_down(x, m):
    return (x // m) * m


def _round_up(x, m):
    return ((x + m - 1) // m) * m


def _vmem_capacity_bytes():
    try:
        info = pltpu.get_tpu_info()
        cap = getattr(info, "vmem_capacity_bytes", None)
        if cap:
            return int(cap)
    except Exception:
        pass
    return 64 * _MIB  # conservative default (v7x per-TC capacity)


def _layernorm_kernel(x_ref, g_ref, o_ref, *, eps, stable):
    # (block_rows, feats) tile; all statistics in f32 regardless of input dtype.
    x = x_ref[...].astype(jnp.float32)
    if stable:
        # Matches torch x.amax (signed max): rows with max<=0 can produce inf/NaN,
        # same as the reference module.
        x = x / jnp.max(x, axis=-1, keepdims=True)
    mean = jnp.mean(x, axis=-1, keepdims=True)
    xc = x - mean                                          # reused for var and output
    var = jnp.mean(xc * xc, axis=-1, keepdims=True)        # unbiased=False, two-pass
    inv = jax.lax.rsqrt(var + eps)                         # EUP transcendental
    o_ref[...] = (xc * inv * g_ref[...]).astype(o_ref.dtype)  # g already f32 (hoisted cast)


def _layer_norm_xla(x, g, *, stable, eps):
    # Fallback for lane-unfriendly feature sizes (feats % 128 != 0).
    xf = x.astype(jnp.float32)
    if stable:
        xf = xf / jnp.max(xf, axis=-1, keepdims=True)
    mean = jnp.mean(xf, axis=-1, keepdims=True)
    xc = xf - mean
    var = jnp.mean(xc * xc, axis=-1, keepdims=True)
    y = xc * jax.lax.rsqrt(var + eps) * g.astype(jnp.float32)
    return y.astype(x.dtype)


def layer_norm(x, g, *, stable=False):
    """Forward of imagen_pytorch.LayerNorm with dim=-1 (module default).

    y = (x - mean(x, -1)) * rsqrt(var(x, -1, unbiased=False) + eps) * g
    eps = 1e-5 for float32 input, 1e-3 otherwise.
    """
    # TODO(synk): dim != -1 (e.g. ChanLayerNorm's dim=-3) would need a moveaxis here.
    orig_dtype = x.dtype
    feats = x.shape[-1]
    assert g.shape[-1] == feats
    eps = 1e-5 if orig_dtype == jnp.float32 else 1e-3

    # Narrow / misaligned feature axis: masked lane stores quarter the achievable
    # bandwidth, so let XLA handle it instead of a degraded Pallas kernel.
    if feats % 128 != 0:
        return _layer_norm_xla(x, g, stable=stable, eps=eps)

    rows = 1
    for d in x.shape[:-1]:
        rows *= d
    x2d = x.reshape(rows, feats)                  # metadata-only reshape (contiguous)
    g32 = g.reshape(1, feats).astype(jnp.float32)  # cast hoisted out of the kernel

    itemsize = x2d.dtype.itemsize
    sublane = {4: 8, 2: 16, 1: 32}.get(itemsize, 8)   # dtype-native sublane multiple

    vmem_cap = _vmem_capacity_bytes()
    vmem_limit = int(min(max(vmem_cap // 2, 40 * _MIB), 80 * _MIB))
    target_bytes = int(min(8 * _MIB, vmem_limit // 8))   # input bytes per tile

    row_bytes = feats * itemsize
    rows_per_block = max(sublane, target_bytes // row_bytes)
    if rows_per_block >= rows:
        block_rows = rows                                  # full dim: any row count OK
    else:
        block_rows = max(sublane, _round_down(rows_per_block, sublane))

    grid_n = pl.cdiv(rows, block_rows)
    # Best-effort even grid so the ("parallel",) axis splits evenly over v7x's 2 TCs.
    if grid_n > 1 and grid_n % 2 == 1:
        cand = max(sublane, _round_up(pl.cdiv(rows, grid_n + 1), sublane))
        if pl.cdiv(rows, cand) % 2 == 0:
            block_rows = cand
            grid_n = pl.cdiv(rows, cand)

    out2d = pl.pallas_call(
        functools.partial(_layernorm_kernel, eps=eps, stable=stable),
        out_shape=jax.ShapeDtypeStruct((rows, feats), orig_dtype),
        grid_spec=pltpu.PrefetchScalarGridSpec(
            num_scalar_prefetch=0,
            grid=(grid_n,),
            in_specs=[
                pl.BlockSpec((block_rows, feats), lambda i: (i, 0)),
                pl.BlockSpec((1, feats), lambda i: (0, 0)),
            ],
            out_specs=pl.BlockSpec((block_rows, feats), lambda i: (i, 0)),
        ),
        compiler_params=pltpu.CompilerParams(
            dimension_semantics=("parallel",),   # rows independent; shards across TCs on v7x
            vmem_limit_bytes=vmem_limit,
        ),
    )(x2d, g32)

    return out2d.reshape(x.shape)


def _layer_norm_ref(x, g, *, stable=False):
    eps = 1e-5 if x.dtype == jnp.float32 else 1e-3
    xf = x.astype(jnp.float32)
    if stable:
        xf = xf / jnp.max(xf, axis=-1, keepdims=True)
    mean = jnp.mean(xf, axis=-1, keepdims=True)
    var = jnp.mean(jnp.square(xf - mean), axis=-1, keepdims=True)
    y = (xf - mean) * jax.lax.rsqrt(var + eps) * g.astype(jnp.float32)
    return y.astype(x.dtype)


if __name__ == "__main__":
    key = jax.random.PRNGKey(0)
    kx, kg, kx2, kg2 = jax.random.split(key, 4)

    # Lane-friendly hidden size -> Pallas kernel path (batch=2, seq=8, hidden=256).
    x = jax.random.normal(kx, (2, 8, 256), dtype=jnp.float32)
    g = 1.0 + 0.1 * jax.random.normal(kg, (256,), dtype=jnp.float32)
    y = layer_norm(x, g, stable=False)
    jax.block_until_ready(y)
    y_ref = _layer_norm_ref(x, g, stable=False)
    assert y.shape == x.shape, (y.shape, x.shape)
    assert y.dtype == x.dtype, (y.dtype, x.dtype)
    assert bool(jnp.allclose(y, y_ref, rtol=1e-5, atol=1e-5)), float(
        jnp.max(jnp.abs(y - y_ref))
    )

    # Narrow hidden size (32): exercises the explicit XLA fallback path.
    x2 = jax.random.normal(kx2, (2, 8, 32), dtype=jnp.float32)
    g2 = 1.0 + 0.1 * jax.random.normal(kg2, (32,), dtype=jnp.float32)
    y2 = layer_norm(x2, g2, stable=False)
    jax.block_until_ready(y2)
    y2_ref = _layer_norm_ref(x2, g2, stable=False)
    assert bool(jnp.allclose(y2, y2_ref, rtol=1e-5, atol=1e-5))

    print("KERNEL_OK")
</pallas_src>

<mosaic_0001>
module attributes {stable_mosaic.version = 11 : i64} {
  func.func @_layernorm_kernel(%arg0: i32, %arg1: memref<16x256xf32, #tpu.memory_space<vmem>>, %arg2: memref<1x256xf32, #tpu.memory_space<vmem>>, %arg3: memref<16x256xf32, #tpu.memory_space<vmem>>) attributes {dimension_semantics = [#tpu.dimension_semantics<parallel>], iteration_bounds = array<i64: 1>, scalar_prefetch = 0 : i64, scratch_operands = 0 : i64, tpu.core_type = #tpu.core_type<tc>, window_params = [{transform_indices = @transform_0, window_bounds = array<i64: 16, 256>}, {pipeline_mode = #tpu.pipeline_mode<synchronous>, transform_indices = @transform_1, window_bounds = array<i64: 1, 256>}, {transform_indices = @transform_2, window_bounds = array<i64: 16, 256>}]} {
    %c0 = arith.constant 0 : index
    %c0_0 = arith.constant 0 : index
    %0 = vector.load %arg1[%c0, %c0_0] : memref<16x256xf32, #tpu.memory_space<vmem>>, vector<16x256xf32>
    %cst = arith.constant dense<0.000000e+00> : vector<16xf32>
    %1 = vector.multi_reduction <add>, %0, %cst [1] : vector<16x256xf32> to vector<16xf32>
    %2 = vector.shape_cast %1 : vector<16xf32> to vector<16x1xf32>
    %cst_1 = arith.constant 2.560000e+02 : f32
    %3 = vector.broadcast %cst_1 : f32 to vector<16x1xf32>
    %4 = arith.divf %2, %3 : vector<16x1xf32>
    %5 = vector.broadcast %4 : vector<16x1xf32> to vector<16x256xf32>
    %6 = arith.subf %0, %5 : vector<16x256xf32>
    %7 = arith.mulf %6, %6 : vector<16x256xf32>
    %cst_2 = arith.constant dense<0.000000e+00> : vector<16xf32>
    %8 = vector.multi_reduction <add>, %7, %cst_2 [1] : vector<16x256xf32> to vector<16xf32>
    %9 = vector.shape_cast %8 : vector<16xf32> to vector<16x1xf32>
    %cst_3 = arith.constant 2.560000e+02 : f32
    %10 = vector.broadcast %cst_3 : f32 to vector<16x1xf32>
    %11 = arith.divf %9, %10 : vector<16x1xf32>
    %cst_4 = arith.constant 9.99999974E-6 : f32
    %12 = vector.broadcast %cst_4 : f32 to vector<16x1xf32>
    %13 = arith.addf %11, %12 : vector<16x1xf32>
    %14 = math.rsqrt %13 : vector<16x1xf32>
    %15 = vector.broadcast %14 : vector<16x1xf32> to vector<16x256xf32>
    %16 = arith.mulf %6, %15 : vector<16x256xf32>
    %c0_5 = arith.constant 0 : index
    %c0_6 = arith.constant 0 : index
    %17 = vector.load %arg2[%c0_5, %c0_6] : memref<1x256xf32, #tpu.memory_space<vmem>>, vector<1x256xf32>
    %18 = vector.broadcast %17 : vector<1x256xf32> to vector<16x256xf32>
    %19 = arith.mulf %16, %18 : vector<16x256xf32>
    %c0_7 = arith.constant 0 : index
    %c0_8 = arith.constant 0 : index
    %20 = vector.load %arg3[%c0_7, %c0_8] : memref<16x256xf32, #tpu.memory_space<vmem>>, vector<16x256xf32>
    tpu.vector_store %arg3[%c0_7, %c0_8], %19 {strides = array<i32>} : memref<16x256xf32, #tpu.memory_space<vmem>>, vector<16x256xf32>,
    return
  }
  func.func @transform_0(%arg0: i32) -> (i32, i32) {
    %c0_i32 = arith.constant 0 : i32
    %c0_i32_0 = arith.constant 0 : i32
    return %arg0, %c0_i32 : i32, i32
  }
  func.func @transform_1(%arg0: i32) -> (i32, i32) {
    %c0_i32 = arith.constant 0 : i32
    %c0_i32_0 = arith.constant 0 : i32
    %c0_i32_1 = arith.constant 0 : i32
    return %c0_i32, %c0_i32_0 : i32, i32
  }
  func.func @transform_2(%arg0: i32) -> (i32, i32) {
    %c0_i32 = arith.constant 0 : i32
    %c0_i32_0 = arith.constant 0 : i32
    return %arg0, %c0_i32 : i32, i32
  }
}

</mosaic_0001>

<llo_original>
// kernel: tpu_custom_call.1
$region0: #{tpu_custom_call.1}
  #allocation0 [shape = 'u32[]', space=smem, size = 0x4, offset = 0x4, fixed_abs, tag = 'smem constant byte address 0x4 - core index']
  #allocation1 [shape = 'u32[144,128]{1,0:T(1,128)}', space=vmem, size = 0x12000, scoped, tag = 'internal scratch']
  %s0 = inlined_call_operand.hbm [shape: f32[16,256], index: 0, kind: input, shape index: {}]
  %s1 = inlined_call_operand.vmem [shape: f32[1,256], index: 1, kind: input, shape index: {}]
  %s2 = inlined_call_operand.hbm [shape: f32[16,256], index: 2, kind: output, shape index: {}]
  %s3 = sld [smem:[#allocation0]]
  $region22: #{tpu_custom_call.1} parent=0
    _
  %s5 = ssub.s32 1, %s3
  %s6 = scalar_select 0, %s5, %s3
  $region1: #{tpu_custom_call.1} parent=0
    #allocation2 [shape = 'u8[16384]{0}', space=vmem, size = 0x4000, scoped, tag = 'input window, operand 0, single buffered']
    #allocation3 [shape = 's32[1]{0}', space=sflag, size = 0x4, scoped, tag = 'scoped memory for tpu_custom_call.1']
    #allocation4 [shape = 's32[1]{0}', space=sflag, size = 0x4, scoped, tag = 'scoped memory for tpu_custom_call.1']
    #allocation5 [shape = 'u8[16384]{0}', space=vmem, size = 0x4000, scoped, tag = 'output window, operand 0, single buffered']
    %7 = vsyncpa [#allocation3], 0
    %8 = vsyncpa [#allocation4], 0
    // Predicated region
    $region2: #{tpu_custom_call.1} parent=1 // pred_check
      _
    $region3: #{tpu_custom_call.1} parent=1 // pred_check_branch
      %10 = sbr.rel (0) target = $region5
    $region4: #{tpu_custom_call.1} parent=1 // pred_region
      %s12 = ssub.s32 512, 512
      %13 = vsyncadd [#allocation3], %s12
      %s14 = sshll.u32 [#allocation2], 4
      %s15 = int_to_ptr.vmem [resolvable:$true] %s14
      %20 = dma.hbm_to_vmem [thread:$0]  %s0, 512, %s15, [#allocation3], 256, 256, 16
    $region5: #{tpu_custom_call.1} parent=1 // pred_fallthru
      _
    // Predicated region
    $region6: #{tpu_custom_call.1} parent=1 // pred_check
      _
    $region7: #{tpu_custom_call.1} parent=1 // pred_check_branch
      %22 = sbr.rel (0) target = $region9
    $region8: #{tpu_custom_call.1} parent=1 // pred_region
      _
    $region9: #{tpu_custom_call.1} parent=1 // pred_fallthru
      _
    // Predicated region
    $region10: #{tpu_custom_call.1} parent=1 // pred_check
      _
    $region11: #{tpu_custom_call.1} parent=1 // pred_check_branch
      %24 = sbr.rel (0) target = $region13
    $region12: #{tpu_custom_call.1} parent=1 // pred_region
      %25 = dma.done [#allocation3], 512
    $region13: #{tpu_custom_call.1} parent=1 // pred_fallthru
      _
    %v26 = vld [vmem:[#allocation2] sm:$0xff]
    %v27 = vld [vmem:[#allocation2 + $0x8] sm:$0xff]
    %v28 = vld [vmem:[#allocation2 + $0x10] sm:$0xff]
    %v29 = vld [vmem:[#allocation2 + $0x18] sm:$0xff]
    %v30 = vadd.f32 %v26, %v27
    %31 = vadd.xlane.f32.xlu0 %v30
    %v32 = vpop.xlane.xlu0 %31
    %v33 = vadd.f32 %v28, %v29
    %34 = vadd.xlane.f32.xlu0 %v33
    %v35 = vpop.xlane.xlu0 %34
    %v36 = vrcp.pop 256.0
    %v37 = vmul.f32 %v32, %v36
    %v38 = vmul.f32 %v35, %v36
    %v39 = vsub.f32 %v26, %v37
    %v40 = vsub.f32 %v27, %v37
    %v41 = vsub.f32 %v28, %v38
    %v42 = vsub.f32 %v29, %v38
    %v43 = vmul.f32 %v39, %v39
    %v44 = vmul.f32 %v40, %v40
    %v45 = vmul.f32 %v41, %v41
    %v46 = vmul.f32 %v42, %v42
    %v47 = vadd.f32 %v43, %v44
    %48 = vadd.xlane.f32.xlu0 %v47
    %v49 = vpop.xlane.xlu0 %48
    %v50 = vadd.f32 %v45, %v46
    %51 = vadd.xlane.f32.xlu0 %v50
    %v52 = vpop.xlane.xlu0 %51
    %v53 = vmul.f32 %v49, %v36
    %v54 = vmul.f32 %v52, %v36
    %v55 = vadd.f32 %v53, 1e-05
    %v56 = vadd.f32 %v54, 1e-05
    %v57 = vrsqrt.pop %v55
    %v58 = vrsqrt.pop %v56
    %v59 = vmul.f32 %v39, %v57
    %v60 = vmul.f32 %v40, %v57
    %v61 = vmul.f32 %v41, %v58
    %v62 = vmul.f32 %v42, %v58
    %v63 = vld [vmem:[%s1] sm:$0x3]
    %v65 = vlaneseq
    %v66 = vshrl.u32 %v65, 7
    %v67 = vsub.s32 0, %v66
    %v68 = vrot.slane %v63, %v67
    %v69 = vlaneseq
    %v70 = vshrl.u32 %v69, 7
    %v71 = vsub.s32 1, %v70
    %v72 = vrot.slane %v63, %v71
    %v75 = vmul.f32 %v59, %v68
    %v76 = vmul.f32 %v60, %v72
    %v77 = vmul.f32 %v61, %v68
    %v78 = vmul.f32 %v62, %v72
    %79 = vst [vmem:[#allocation5] sm:$0xff] %v75
    %80 = vst [vmem:[#allocation5 + $0x8] sm:$0xff] %v76
    %81 = vst [vmem:[#allocation5 + $0x10] sm:$0xff] %v77
    %82 = vst [vmem:[#allocation5 + $0x18] sm:$0xff] %v78
    // Predicated region
    $region14: #{tpu_custom_call.1} parent=1 // pred_check
      _
    $region15: #{tpu_custom_call.1} parent=1 // pred_check_branch
      %84 = sbr.rel (0) target = $region17
    $region16: #{tpu_custom_call.1} parent=1 // pred_region
      %s86 = ssub.s32 512, 512
      %87 = vsyncadd [#allocation4], %s86
      %s88 = sshll.u32 [#allocation5], 4
      %s89 = int_to_ptr.vmem [resolvable:$true] %s88
      %94 = dma.vmem_to_hbm [thread:$0]  %s89, 512, %s2, [#allocation4], 256, 256, 16
    $region17: #{tpu_custom_call.1} parent=1 // pred_fallthru
      _
    // Predicated region
    $region18: #{tpu_custom_call.1} parent=1 // pred_check
      _
    $region19: #{tpu_custom_call.1} parent=1 // pred_check_branch
      %96 = sbr.rel (0) target = $region21
    $region20: #{tpu_custom_call.1} parent=1 // pred_region
      %97 = dma.done [#allocation4], 512
    $region21: #{tpu_custom_call.1} parent=1 // pred_fallthru
      _
    %98 = vsyncpa [#allocation3], 1
    %99 = vsyncpa [#allocation4], 1

</llo_original>
